<compile_context>
chip_gen: v7x
topology: tpu7x:2x2x1
jax: 0.10.0
libtpu: 0.0.40
codegen_flags: <defaults>
</compile_context>

<pallas_src>
import jax
import jax.numpy as jnp
from jax.experimental import pallas as pl
from jax.experimental.pallas import tpu as pltpu


def _sq_err_kernel(pred_ref, actual_ref, out_ref):
    d = pred_ref[...] - actual_ref[...]
    out_ref[...] = d * d


# ~2 MiB per operand tile -> 3 operands x 2 buffers = 12 MiB resident in VMEM,
# safely under the default scoped limit on v5e (16 MiB), v6e (32 MiB), v7x (32 MiB).
_TARGET_TILE_BYTES = 2 * 1024 * 1024


def my_l2_forward(pred, actual, ps=None, y=None):
    """Elementwise (pred - actual)**2, reduction='none'.

    `ps` / `y` are accepted but unused, matching the PyTorch module.
    """
    assert pred.shape == actual.shape, "mse_loss(reduction='none') requires same shape"
    orig_shape = pred.shape
    dtype = pred.dtype
    total = pred.size
    itemsize = jnp.dtype(dtype).itemsize

    # Pick the widest lane-dense layout that divides the flat length, so we can
    # reshape directly (no pad -> no extra full HBM pass over inputs/outputs).
    lanes = None
    for cand in (1024, 512, 256, 128):
        if total % cand == 0:
            lanes = cand
            break

    if lanes is None:
        # Ragged case (total not a multiple of 128) — rare for NCHW tensors.
        # TODO(synk): handle the ragged tail in-kernel with a masked store
        # instead of the host-side pad+slice below.
        lanes = 128
        padded = pl.cdiv(total, lanes) * lanes
        p2 = jnp.pad(pred.reshape(-1), (0, padded - total)).reshape(-1, lanes)
        a2 = jnp.pad(actual.reshape(-1), (0, padded - total)).reshape(-1, lanes)
        ragged = True
    else:
        p2 = pred.reshape(-1, lanes)
        a2 = actual.reshape(-1, lanes)
        ragged = False

    rows = p2.shape[0]

    # Rows per block targeting ~2 MiB tiles; for f32/bf16 with lanes<=1024 this
    # lands on a multiple of 512 (good sublane packing for both dtypes).
    target_rows = max(8, (_TARGET_TILE_BYTES // (lanes * itemsize)) // 8 * 8)

    if rows <= target_rows:
        # Whole problem fits one VMEM block: no grid, no pipeline overhead.
        out = pl.pallas_call(
            _sq_err_kernel,
            out_shape=jax.ShapeDtypeStruct((rows, lanes), dtype),
        )(p2, a2)
    else:
        block_rows = target_rows
        grid = (pl.cdiv(rows, block_rows),)  # partial last block handled by Pallas
        out = pl.pallas_call(
            _sq_err_kernel,
            out_shape=jax.ShapeDtypeStruct((rows, lanes), dtype),
            grid=grid,
            in_specs=[
                pl.BlockSpec((block_rows, lanes), lambda i: (i, 0)),
                pl.BlockSpec((block_rows, lanes), lambda i: (i, 0)),
            ],
            out_specs=pl.BlockSpec((block_rows, lanes), lambda i: (i, 0)),
            compiler_params=pltpu.CompilerParams(
                dimension_semantics=("parallel",),
                vmem_limit_bytes=32 * 1024 * 1024,
            ),
        )(p2, a2)

    if ragged:
        return out.reshape(-1)[:total].reshape(orig_shape)
    return out.reshape(orig_shape)


if __name__ == "__main__":
    key = jax.random.PRNGKey(0)
    k1, k2, k3, k4 = jax.random.split(key, 4)

    # Small NCHW-like shapes consistent with the module's usage.
    pred = jax.random.normal(k1, (2, 4, 16, 16), dtype=jnp.float32)
    actual = jax.random.normal(k2, (2, 4, 16, 16), dtype=jnp.float32)
    ps = jax.random.normal(k3, (2, 4, 16, 16), dtype=jnp.float32)  # unused, as in PyTorch
    y = jax.random.normal(k4, (2, 4, 16, 16), dtype=jnp.float32)   # unused, as in PyTorch

    loss = my_l2_forward(pred, actual, ps, y)
    jax.block_until_ready(loss)

    # sanity check vs pure-JAX reference
    ref = (pred - actual) ** 2
    assert loss.shape == pred.shape
    assert jnp.allclose(loss, ref, atol=1e-6), "mismatch vs reference"

    # also exercise the gridded (large-input) path once to make sure it compiles
    big_p = jax.random.normal(k1, (4, 8, 128, 128), dtype=jnp.float32)
    big_a = jax.random.normal(k2, (4, 8, 128, 128), dtype=jnp.float32)
    big_out = my_l2_forward(big_p, big_a)
    jax.block_until_ready(big_out)
    assert jnp.allclose(big_out, (big_p - big_a) ** 2, atol=1e-6), "mismatch (big)"

    print("KERNEL_OK")
</pallas_src>

<mosaic_0001>
module attributes {stable_mosaic.version = 11 : i64} {
  func.func @_sq_err_kernel(%arg0: memref<2x1024xf32, #tpu.memory_space<vmem>>, %arg1: memref<2x1024xf32, #tpu.memory_space<vmem>>, %arg2: memref<2x1024xf32, #tpu.memory_space<vmem>>) attributes {dimension_semantics = [], scalar_prefetch = 0 : i64, scratch_operands = 0 : i64, tpu.core_type = #tpu.core_type<tc>} {
    %c0 = arith.constant 0 : index
    %c0_0 = arith.constant 0 : index
    %0 = vector.load %arg0[%c0, %c0_0] : memref<2x1024xf32, #tpu.memory_space<vmem>>, vector<2x1024xf32>
    %c0_1 = arith.constant 0 : index
    %c0_2 = arith.constant 0 : index
    %1 = vector.load %arg1[%c0_1, %c0_2] : memref<2x1024xf32, #tpu.memory_space<vmem>>, vector<2x1024xf32>
    %2 = arith.subf %0, %1 : vector<2x1024xf32>
    %3 = arith.mulf %2, %2 : vector<2x1024xf32>
    %c0_3 = arith.constant 0 : index
    %c0_4 = arith.constant 0 : index
    %4 = vector.load %arg2[%c0_3, %c0_4] : memref<2x1024xf32, #tpu.memory_space<vmem>>, vector<2x1024xf32>
    tpu.vector_store %arg2[%c0_3, %c0_4], %3 {strides = array<i32>} : memref<2x1024xf32, #tpu.memory_space<vmem>>, vector<2x1024xf32>,
    return
  }
}

</mosaic_0001>

<llo_original>
// kernel: tpu_custom_call.1
$region0: #{tpu_custom_call.1}
  #allocation0 [shape = 'u32[]', space=smem, size = 0x4, offset = 0x4, fixed_abs, tag = 'smem constant byte address 0x4 - core index']
  #allocation1 [shape = 'u32[144,128]{1,0:T(1,128)}', space=vmem, size = 0x12000, scoped, tag = 'internal scratch']
  %s0 = inlined_call_operand.hbm [shape: f32[2,1024], index: 0, kind: input, shape index: {}]
  %s1 = inlined_call_operand.hbm [shape: f32[2,1024], index: 1, kind: input, shape index: {}]
  %s2 = inlined_call_operand.hbm [shape: f32[2,1024], index: 2, kind: output, shape index: {}]
  %s3 = sld [smem:[#allocation0]]
  $region26: #{tpu_custom_call.1} parent=0
    _
  %s5 = ssub.s32 1, %s3
  %s6 = scalar_select 0, %s5, %s3
  $region1: #{tpu_custom_call.1} parent=0
    #allocation2 [shape = 'u8[8192]{0}', space=vmem, size = 0x2000, scoped, tag = 'input window, operand 0, single buffered']
    #allocation3 [shape = 's32[1]{0}', space=sflag, size = 0x4, scoped, tag = 'scoped memory for tpu_custom_call.1']
    #allocation4 [shape = 's32[1]{0}', space=sflag, size = 0x4, scoped, tag = 'scoped memory for tpu_custom_call.1']
    #allocation5 [shape = 'u8[8192]{0}', space=vmem, size = 0x2000, scoped, tag = 'input window, operand 1, single buffered']
    #allocation6 [shape = 's32[1]{0}', space=sflag, size = 0x4, scoped, tag = 'scoped memory for tpu_custom_call.1']
    #allocation7 [shape = 'u8[8192]{0}', space=vmem, size = 0x2000, scoped, tag = 'output window, operand 0, single buffered']
    %7 = vsyncpa [#allocation3], 0
    %8 = vsyncpa [#allocation6], 0
    %9 = vsyncpa [#allocation4], 0
    // Predicated region
    $region2: #{tpu_custom_call.1} parent=1 // pred_check
      _
    $region3: #{tpu_custom_call.1} parent=1 // pred_check_branch
      %11 = sbr.rel (0) target = $region5
    $region4: #{tpu_custom_call.1} parent=1 // pred_region
      %s13 = ssub.s32 256, 256
      %14 = vsyncadd [#allocation3], %s13
      %s16 = sshll.u32 [#allocation2], 4
      %s17 = int_to_ptr.vmem [resolvable:$true] %s16
      %19 = dma.hbm_to_vmem [thread:$0]  %s0, 256, %s17, [#allocation3]
    $region5: #{tpu_custom_call.1} parent=1 // pred_fallthru
      _
    // Predicated region
    $region6: #{tpu_custom_call.1} parent=1 // pred_check
      _
    $region7: #{tpu_custom_call.1} parent=1 // pred_check_branch
      %21 = sbr.rel (0) target = $region9
    $region8: #{tpu_custom_call.1} parent=1 // pred_region
      %s23 = ssub.s32 256, 256
      %24 = vsyncadd [#allocation6], %s23
      %s26 = sshll.u32 [#allocation5], 4
      %s27 = int_to_ptr.vmem [resolvable:$true] %s26
      %29 = dma.hbm_to_vmem [thread:$0]  %s1, 256, %s27, [#allocation6]
    $region9: #{tpu_custom_call.1} parent=1 // pred_fallthru
      _
    // Predicated region
    $region10: #{tpu_custom_call.1} parent=1 // pred_check
      _
    $region11: #{tpu_custom_call.1} parent=1 // pred_check_branch
      %31 = sbr.rel (0) target = $region13
    $region12: #{tpu_custom_call.1} parent=1 // pred_region
      %32 = dma.done [#allocation3], 256
    $region13: #{tpu_custom_call.1} parent=1 // pred_fallthru
      _
    // Predicated region
    $region14: #{tpu_custom_call.1} parent=1 // pred_check
      _
    $region15: #{tpu_custom_call.1} parent=1 // pred_check_branch
      %34 = sbr.rel (0) target = $region17
    $region16: #{tpu_custom_call.1} parent=1 // pred_region
      %35 = dma.done [#allocation6], 256
    $region17: #{tpu_custom_call.1} parent=1 // pred_fallthru
      _
    %v36 = vld [vmem:[#allocation2] sm:$0xff]
    %v37 = vld [vmem:[#allocation2 + $0x8] sm:$0xff]
    %v38 = vld [vmem:[#allocation5] sm:$0xff]
    %v39 = vld [vmem:[#allocation5 + $0x8] sm:$0xff]
    %v40 = vsub.f32 %v36, %v38
    %v41 = vsub.f32 %v37, %v39
    %v42 = vmul.f32 %v40, %v40
    %v43 = vmul.f32 %v41, %v41
    %44 = vst [vmem:[#allocation7] sm:$0xff] %v42
    %45 = vst [vmem:[#allocation7 + $0x8] sm:$0xff] %v43
    // Predicated region
    $region18: #{tpu_custom_call.1} parent=1 // pred_check
      _
    $region19: #{tpu_custom_call.1} parent=1 // pred_check_branch
      %47 = sbr.rel (0) target = $region21
    $region20: #{tpu_custom_call.1} parent=1 // pred_region
      %s49 = ssub.s32 256, 256
      %50 = vsyncadd [#allocation4], %s49
      %s52 = sshll.u32 [#allocation7], 4
      %s53 = int_to_ptr.vmem [resolvable:$true] %s52
      %55 = dma.vmem_to_hbm [thread:$0]  %s53, 256, %s2, [#allocation4]
    $region21: #{tpu_custom_call.1} parent=1 // pred_fallthru
      _
    // Predicated region
    $region22: #{tpu_custom_call.1} parent=1 // pred_check
      _
    $region23: #{tpu_custom_call.1} parent=1 // pred_check_branch
      %57 = sbr.rel (0) target = $region25
    $region24: #{tpu_custom_call.1} parent=1 // pred_region
      %58 = dma.done [#allocation4], 256
    $region25: #{tpu_custom_call.1} parent=1 // pred_fallthru
      _
    %59 = vsyncpa [#allocation3], 1
    %60 = vsyncpa [#allocation6], 1
    %61 = vsyncpa [#allocation4], 1

</llo_original>
